<compile_context>
chip_gen: v5e
topology: v5e:2x2
jax: 0.10.0
libtpu: 0.0.40
codegen_flags: <defaults>
</compile_context>

<pallas_src>
import jax
import jax.numpy as jnp
from jax.experimental import pallas as pl
from jax.experimental.pallas import tpu as pltpu

INPUT_SIZE = 8
HIDDEN_SIZE = 12
NUM_CLASSES = 1

BATCH_TILE = 2048  # lane-axis batch tile for large batches; multiple of 128


def _vanilla_net_kernel(x_ref, w1_ref, b1_ref, w2_ref, b2_ref, w3_ref, b3_ref,
                        o_ref):
    x_t = x_ref[...]                                                  # [in, TB]
    h1 = jnp.dot(w1_ref[...], x_t,
                 preferred_element_type=jnp.float32) + b1_ref[...]   # [H, TB]
    h1 = jnp.maximum(h1, 0.0)                                         # ReLU
    # dropout (eval) == identity
    h2 = jnp.dot(w2_ref[...], h1,
                 preferred_element_type=jnp.float32) + b2_ref[...]   # [H, TB]
    h2 = jnp.maximum(h2, 0.0)                                         # ReLU
    # dropout (eval) == identity
    out = jnp.dot(w3_ref[...], h2,
                  preferred_element_type=jnp.float32) + b3_ref[...]  # [1, TB]
    o_ref[...] = out.astype(o_ref.dtype)


def vanilla_net_forward(x, params, *, block_b=BATCH_TILE):
    """x: [B, INPUT_SIZE] float32 -> [B, NUM_CLASSES] float32."""
    w1, b1, w2, b2, w3, b3 = params   # weights [out, in], biases [out, 1]
    batch = x.shape[0]

    # Clamp the lane tile to the 128-rounded batch so small batches don't pay
    # for a full-width padded tile, then pad the batch to a tile multiple so
    # every block (and every store) is lane-dense.  Padded columns produce
    # garbage that is sliced off below; there is no cross-batch reduction.
    batch_rounded = pl.cdiv(batch, 128) * 128
    block_b = min(block_b, batch_rounded)
    padded = pl.cdiv(batch, block_b) * block_b

    x_t = x.T                                               # [in, B]
    if padded != batch:
        x_t = jnp.pad(x_t, ((0, 0), (0, padded - batch)))

    grid = (padded // block_b,)

    out_t = pl.pallas_call(
        _vanilla_net_kernel,
        out_shape=jax.ShapeDtypeStruct((NUM_CLASSES, padded), jnp.float32),
        grid=grid,
        in_specs=[
            pl.BlockSpec((INPUT_SIZE, block_b), lambda i: (0, i)),   # x tile
            pl.BlockSpec(w1.shape, lambda i: (0, 0)),                # resident
            pl.BlockSpec(b1.shape, lambda i: (0, 0)),
            pl.BlockSpec(w2.shape, lambda i: (0, 0)),
            pl.BlockSpec(b2.shape, lambda i: (0, 0)),
            pl.BlockSpec(w3.shape, lambda i: (0, 0)),
            pl.BlockSpec(b3.shape, lambda i: (0, 0)),
        ],
        out_specs=pl.BlockSpec((NUM_CLASSES, block_b), lambda i: (0, i)),
        compiler_params=pltpu.CompilerParams(
            dimension_semantics=("parallel",)),
    )(x_t, w1, b1, w2, b2, w3, b3)

    return out_t[:, :batch].T                               # [B, NUM_CLASSES]


def init_params(key):
    """Deterministic init mimicking PyTorch Linear's U(-1/sqrt(fan_in), +)."""
    def linear(key, fan_in, fan_out):
        kw, kb = jax.random.split(key)
        bound = 1.0 / jnp.sqrt(fan_in)
        # PyTorch convention: weight [out, in]; bias stored as [out, 1] so it
        # broadcasts over the lane/batch axis inside the kernel.
        w = jax.random.uniform(kw, (fan_out, fan_in), jnp.float32,
                               -bound, bound)
        b = jax.random.uniform(kb, (fan_out, 1), jnp.float32, -bound, bound)
        return w, b

    k1, k2, k3 = jax.random.split(key, 3)
    w1, b1 = linear(k1, INPUT_SIZE, HIDDEN_SIZE)    # fc1
    w2, b2 = linear(k2, HIDDEN_SIZE, HIDDEN_SIZE)   # fc2
    w3, b3 = linear(k3, HIDDEN_SIZE, NUM_CLASSES)   # fc3
    # (input_layer / hidden_layer1 / hidden_layer2 exist in __init__ but are
    #  unused by forward, so they are not materialized here.)
    return w1, b1, w2, b2, w3, b3


if __name__ == "__main__":
    key = jax.random.PRNGKey(0)
    kx, kp = jax.random.split(key)

    batch = 8
    x = jax.random.normal(kx, (batch, INPUT_SIZE), dtype=jnp.float32)
    params = init_params(kp)

    out = vanilla_net_forward(x, params)
    out = jax.block_until_ready(out)

    # Pure-JAX reference check (weights [out, in], biases [out, 1]).
    w1, b1, w2, b2, w3, b3 = params
    ref = jnp.maximum(x @ w1.T + b1.T, 0.0)
    ref = jnp.maximum(ref @ w2.T + b2.T, 0.0)
    ref = ref @ w3.T + b3.T
    assert out.shape == (batch, NUM_CLASSES)
    assert jnp.allclose(out, ref, atol=1e-5, rtol=1e-5)

    # Also exercise a multi-tile batch to cover the grid > 1 path.
    batch2 = 3000
    x2 = jax.random.normal(kx, (batch2, INPUT_SIZE), dtype=jnp.float32)
    out2 = jax.block_until_ready(vanilla_net_forward(x2, params))
    ref2 = jnp.maximum(x2 @ w1.T + b1.T, 0.0)
    ref2 = jnp.maximum(ref2 @ w2.T + b2.T, 0.0)
    ref2 = ref2 @ w3.T + b3.T
    assert out2.shape == (batch2, NUM_CLASSES)
    assert jnp.allclose(out2, ref2, atol=1e-5, rtol=1e-5)

    print("KERNEL_OK")
</pallas_src>

<mosaic_0001>
module attributes {stable_mosaic.version = 11 : i64} {
  func.func @_vanilla_net_kernel(%arg0: i32, %arg1: memref<8x128xf32, #tpu.memory_space<vmem>>, %arg2: memref<12x8xf32, #tpu.memory_space<vmem>>, %arg3: memref<12x1xf32, #tpu.memory_space<vmem>>, %arg4: memref<12x12xf32, #tpu.memory_space<vmem>>, %arg5: memref<12x1xf32, #tpu.memory_space<vmem>>, %arg6: memref<1x12xf32, #tpu.memory_space<vmem>>, %arg7: memref<1x1xf32, #tpu.memory_space<vmem>>, %arg8: memref<1x128xf32, #tpu.memory_space<vmem>>) attributes {dimension_semantics = [#tpu.dimension_semantics<parallel>], iteration_bounds = array<i64: 1>, scalar_prefetch = 0 : i64, scratch_operands = 0 : i64, tpu.core_type = #tpu.core_type<tc>, window_params = [{transform_indices = @transform_0, window_bounds = array<i64: 8, 128>}, {pipeline_mode = #tpu.pipeline_mode<synchronous>, transform_indices = @transform_1, window_bounds = array<i64: 12, 8>}, {pipeline_mode = #tpu.pipeline_mode<synchronous>, transform_indices = @transform_2, window_bounds = array<i64: 12, 1>}, {pipeline_mode = #tpu.pipeline_mode<synchronous>, transform_indices = @transform_3, window_bounds = array<i64: 12, 12>}, {pipeline_mode = #tpu.pipeline_mode<synchronous>, transform_indices = @transform_4, window_bounds = array<i64: 12, 1>}, {pipeline_mode = #tpu.pipeline_mode<synchronous>, transform_indices = @transform_5, window_bounds = array<i64: 1, 12>}, {pipeline_mode = #tpu.pipeline_mode<synchronous>, transform_indices = @transform_6, window_bounds = array<i64: 1, 1>}, {transform_indices = @transform_7, window_bounds = array<i64: 1, 128>}]} {
    %c0 = arith.constant 0 : index
    %c0_0 = arith.constant 0 : index
    %0 = vector.load %arg1[%c0, %c0_0] : memref<8x128xf32, #tpu.memory_space<vmem>>, vector<8x128xf32>
    %c0_1 = arith.constant 0 : index
    %c0_2 = arith.constant 0 : index
    %1 = vector.load %arg2[%c0_1, %c0_2] : memref<12x8xf32, #tpu.memory_space<vmem>>, vector<12x8xf32>
    %cst = arith.constant dense<0.000000e+00> : vector<12x128xf32>
    %2 = tpu.matmul %1, %0, %cst {dimension_numbers = #tpu.dot_dimension_numbers<[1], [0], [0], [1], [0, 0, 1, 1], [], []>} : vector<12x8xf32>, vector<8x128xf32>, vector<12x128xf32> -> vector<12x128xf32>
    %c0_3 = arith.constant 0 : index
    %c0_4 = arith.constant 0 : index
    %3 = vector.load %arg3[%c0_3, %c0_4] : memref<12x1xf32, #tpu.memory_space<vmem>>, vector<12x1xf32>
    %4 = vector.broadcast %3 : vector<12x1xf32> to vector<12x128xf32>
    %5 = arith.addf %2, %4 : vector<12x128xf32>
    %cst_5 = arith.constant 0.000000e+00 : f32
    %6 = vector.broadcast %cst_5 : f32 to vector<12x128xf32>
    %7 = arith.maximumf %5, %6 : vector<12x128xf32>
    %c0_6 = arith.constant 0 : index
    %c0_7 = arith.constant 0 : index
    %8 = vector.load %arg4[%c0_6, %c0_7] : memref<12x12xf32, #tpu.memory_space<vmem>>, vector<12x12xf32>
    %cst_8 = arith.constant dense<0.000000e+00> : vector<12x128xf32>
    %9 = tpu.matmul %8, %7, %cst_8 {dimension_numbers = #tpu.dot_dimension_numbers<[1], [0], [0], [1], [0, 0, 1, 1], [], []>} : vector<12x12xf32>, vector<12x128xf32>, vector<12x128xf32> -> vector<12x128xf32>
    %c0_9 = arith.constant 0 : index
    %c0_10 = arith.constant 0 : index
    %10 = vector.load %arg5[%c0_9, %c0_10] : memref<12x1xf32, #tpu.memory_space<vmem>>, vector<12x1xf32>
    %11 = vector.broadcast %10 : vector<12x1xf32> to vector<12x128xf32>
    %12 = arith.addf %9, %11 : vector<12x128xf32>
    %cst_11 = arith.constant 0.000000e+00 : f32
    %13 = vector.broadcast %cst_11 : f32 to vector<12x128xf32>
    %14 = arith.maximumf %12, %13 : vector<12x128xf32>
    %c0_12 = arith.constant 0 : index
    %c0_13 = arith.constant 0 : index
    %15 = vector.load %arg6[%c0_12, %c0_13] : memref<1x12xf32, #tpu.memory_space<vmem>>, vector<1x12xf32>
    %cst_14 = arith.constant dense<0.000000e+00> : vector<1x128xf32>
    %16 = tpu.matmul %15, %14, %cst_14 {dimension_numbers = #tpu.dot_dimension_numbers<[1], [0], [0], [1], [0, 0, 1, 1], [], []>} : vector<1x12xf32>, vector<12x128xf32>, vector<1x128xf32> -> vector<1x128xf32>
    %c0_15 = arith.constant 0 : index
    %c0_16 = arith.constant 0 : index
    %17 = vector.load %arg7[%c0_15, %c0_16] : memref<1x1xf32, #tpu.memory_space<vmem>>, vector<1x1xf32>
    %18 = vector.broadcast %17 : vector<1x1xf32> to vector<1x128xf32>
    %19 = arith.addf %16, %18 : vector<1x128xf32>
    %c0_17 = arith.constant 0 : index
    %c0_18 = arith.constant 0 : index
    %20 = vector.load %arg8[%c0_17, %c0_18] : memref<1x128xf32, #tpu.memory_space<vmem>>, vector<1x128xf32>
    tpu.vector_store %arg8[%c0_17, %c0_18], %19 {strides = array<i32>} : memref<1x128xf32, #tpu.memory_space<vmem>>, vector<1x128xf32>,
    return
  }
  func.func @transform_0(%arg0: i32) -> (i32, i32) {
    %c0_i32 = arith.constant 0 : i32
    %c0_i32_0 = arith.constant 0 : i32
    return %c0_i32, %arg0 : i32, i32
  }
  func.func @transform_1(%arg0: i32) -> (i32, i32) {
    %c0_i32 = arith.constant 0 : i32
    %c0_i32_0 = arith.constant 0 : i32
    %c0_i32_1 = arith.constant 0 : i32
    return %c0_i32, %c0_i32_0 : i32, i32
  }
  func.func @transform_2(%arg0: i32) -> (i32, i32) {
    %c0_i32 = arith.constant 0 : i32
    %c0_i32_0 = arith.constant 0 : i32
    %c0_i32_1 = arith.constant 0 : i32
    return %c0_i32, %c0_i32_0 : i32, i32
  }
  func.func @transform_3(%arg0: i32) -> (i32, i32) {
    %c0_i32 = arith.constant 0 : i32
    %c0_i32_0 = arith.constant 0 : i32
    %c0_i32_1 = arith.constant 0 : i32
    return %c0_i32, %c0_i32_0 : i32, i32
  }
  func.func @transform_4(%arg0: i32) -> (i32, i32) {
    %c0_i32 = arith.constant 0 : i32
    %c0_i32_0 = arith.constant 0 : i32
    %c0_i32_1 = arith.constant 0 : i32
    return %c0_i32, %c0_i32_0 : i32, i32
  }
  func.func @transform_5(%arg0: i32) -> (i32, i32) {
    %c0_i32 = arith.constant 0 : i32
    %c0_i32_0 = arith.constant 0 : i32
    %c0_i32_1 = arith.constant 0 : i32
    return %c0_i32, %c0_i32_0 : i32, i32
  }
  func.func @transform_6(%arg0: i32) -> (i32, i32) {
    %c0_i32 = arith.constant 0 : i32
    %c0_i32_0 = arith.constant 0 : i32
    %c0_i32_1 = arith.constant 0 : i32
    return %c0_i32, %c0_i32_0 : i32, i32
  }
  func.func @transform_7(%arg0: i32) -> (i32, i32) {
    %c0_i32 = arith.constant 0 : i32
    %c0_i32_0 = arith.constant 0 : i32
    return %c0_i32, %arg0 : i32, i32
  }
}

</mosaic_0001>

<llo_original>
// kernel: tpu_custom_call.1
$region0: #{tpu_custom_call.1}
  #allocation0 [shape = 'u32[]', space=smem, size = 0x4, offset = 0x4, fixed_abs, tag = 'smem constant byte address 0x4 - core index']
  #allocation1 [shape = 'u32[72,128]{1,0:T(1,128)}', space=vmem, size = 0x9000, scoped, tag = 'internal scratch']
  #allocation2 [shape = 'f32[1,1]{1,0:T(1,128)S(1)}', space=vmem, size = 0x200, scoped, tag = 'scoped memory for tpu_custom_call.1']
  %s0 = inlined_call_operand.vmem [shape: f32[8,128], index: 0, kind: input, shape index: {}]
  %s1 = inlined_call_operand.vmem [shape: f32[12,8], index: 1, kind: input, shape index: {}]
  %s2 = inlined_call_operand.vmem [shape: f32[12,1], index: 2, kind: input, shape index: {}]
  %s3 = inlined_call_operand.vmem [shape: f32[12,12], index: 3, kind: input, shape index: {}]
  %s4 = inlined_call_operand.vmem [shape: f32[12,1], index: 4, kind: input, shape index: {}]
  %s5 = inlined_call_operand.vmem [shape: f32[1,12], index: 5, kind: input, shape index: {}]
  %s6 = inlined_call_operand.<no memory space> [shape: f32[1,1], index: 6, kind: input, shape index: {}]
  %s7 = inlined_call_operand.hbm [shape: f32[1,128], index: 7, kind: output, shape index: {}]
  %s8 = sld [smem:[#allocation0]]
  $region38: #{tpu_custom_call.1} parent=0
    _
  %s10 = ssub.s32 1, %s8
  %s11 = scalar_select 0, %s10, %s8
  %v12 = vstv %s6
  %13 = vst [vmem:[#allocation2] sm:$0x1] %v12
  $region1: #{tpu_custom_call.1} parent=0
    #allocation3 [shape = 'u8[512]{0}', space=vmem, size = 0x400, scoped, tag = 'output window, operand 0, single buffered']
    #allocation4 [shape = 's32[1]{0}', space=sflag, size = 0x4, scoped, tag = 'scoped memory for tpu_custom_call.1']
    %14 = vsyncpa [#allocation4], 0
    // Predicated region
    $region2: #{tpu_custom_call.1} parent=1 // pred_check
      _
    $region3: #{tpu_custom_call.1} parent=1 // pred_check_branch
      %16 = sbr.rel (0) target = $region5
    $region4: #{tpu_custom_call.1} parent=1 // pred_region
      _
    $region5: #{tpu_custom_call.1} parent=1 // pred_fallthru
      _
    // Predicated region
    $region6: #{tpu_custom_call.1} parent=1 // pred_check
      _
    $region7: #{tpu_custom_call.1} parent=1 // pred_check_branch
      %18 = sbr.rel (0) target = $region9
    $region8: #{tpu_custom_call.1} parent=1 // pred_region
      _
    $region9: #{tpu_custom_call.1} parent=1 // pred_fallthru
      _
    // Predicated region
    $region10: #{tpu_custom_call.1} parent=1 // pred_check
      _
    $region11: #{tpu_custom_call.1} parent=1 // pred_check_branch
      %20 = sbr.rel (0) target = $region13
    $region12: #{tpu_custom_call.1} parent=1 // pred_region
      _
    $region13: #{tpu_custom_call.1} parent=1 // pred_fallthru
      _
    // Predicated region
    $region14: #{tpu_custom_call.1} parent=1 // pred_check
      _
    $region15: #{tpu_custom_call.1} parent=1 // pred_check_branch
      %22 = sbr.rel (0) target = $region17
    $region16: #{tpu_custom_call.1} parent=1 // pred_region
      _
    $region17: #{tpu_custom_call.1} parent=1 // pred_fallthru
      _
    // Predicated region
    $region18: #{tpu_custom_call.1} parent=1 // pred_check
      _
    $region19: #{tpu_custom_call.1} parent=1 // pred_check_branch
      %24 = sbr.rel (0) target = $region21
    $region20: #{tpu_custom_call.1} parent=1 // pred_region
      _
    $region21: #{tpu_custom_call.1} parent=1 // pred_fallthru
      _
    // Predicated region
    $region22: #{tpu_custom_call.1} parent=1 // pred_check
      _
    $region23: #{tpu_custom_call.1} parent=1 // pred_check_branch
      %26 = sbr.rel (0) target = $region25
    $region24: #{tpu_custom_call.1} parent=1 // pred_region
      _
    $region25: #{tpu_custom_call.1} parent=1 // pred_fallthru
      _
    // Predicated region
    $region26: #{tpu_custom_call.1} parent=1 // pred_check
      _
    $region27: #{tpu_custom_call.1} parent=1 // pred_check_branch
      %28 = sbr.rel (0) target = $region29
    $region28: #{tpu_custom_call.1} parent=1 // pred_region
      _
    $region29: #{tpu_custom_call.1} parent=1 // pred_fallthru
      _
    %v29 = vld [vmem:[%s0] sm:$0xff]
    %v30 = vld [vmem:[%s1] sm:$0xff]
    %v31 = vld [vmem:[%s1 + $0x8] sm:$0xf]
    %v32 = vld [vmem:[%s2] sm:$0xff]
    %v33 = vld [vmem:[%s2 + $0x8] sm:$0xf]
    %35 = vset.pattern.permute.xlu0 0
    %36 = vperm.xlu0 %35, %v32
    %v37 = vpop.permute.xlu0 %36
    %40 = vset.pattern.permute.xlu0 0
    %41 = vperm.xlu0 %40, %v33
    %v42 = vpop.permute.xlu0 %41
    %vm44 = vcmask 64512
    %v46 = vsel %vm44, %v30, 0
    %v49 = vsel %vm44, %v31, 0
    %51 = vmatpush.msra.mxu0 0.0
    %52 = vmatpush.msra.mxu0 0.0
    %53 = vmatpush.msra.mxu0 0.0
    %54 = vmatpush.msra.mxu0 0.0
    %55 = vmatpush.msra.mxu0 0.0
    %56 = vmatpush.msra.mxu0 0.0
    %57 = vmatpush.msra.mxu0 0.0
    %58 = vmatpush.msra.mxu0 0.0
    %59 = vmatpush.msra.mxu0 0.0
    %60 = vmatpush.msra.mxu0 0.0
    %61 = vmatpush.msra.mxu0 0.0
    %62 = vmatpush.msra.mxu0 0.0
    %63 = vmatpush.msra.mxu0 0.0
    %64 = vmatpush.msra.mxu0 0.0
    %65 = vmatpush.msra.mxu0 0.0
    %66 = vmatpush.msra.mxu0 %v29
    %67 = vmatmul.f32.gmra.mxu0 %v46
    %v68 = vpop.f32.mrf.mxu0
    %v69 = vadd.f32 %v37, %v68
    %70 = vmatmul.f32.gmra.mxu0 %v49
    %v71 = vpop.f32.mrf.mxu0
    %v72 = vadd.f32 %v42, %v71
    %73 = vdwg.mxu0
    %v74 = vmax.f32 %v69, 0.0
    %v75 = vmax.f32 %v72, 0.0
    %v76 = vld [vmem:[%s3] sm:$0xff]
    %v77 = vld [vmem:[%s3 + $0x8] sm:$0xf]
    %v78 = vld [vmem:[%s4] sm:$0xff]
    %v79 = vld [vmem:[%s4 + $0x8] sm:$0xf]
    %81 = vset.pattern.permute.xlu0 0
    %82 = vperm.xlu0 %81, %v78
    %v83 = vpop.permute.xlu0 %82
    %86 = vset.pattern.permute.xlu0 0
    %87 = vperm.xlu0 %86, %v79
    %v88 = vpop.permute.xlu0 %87
    %vm90 = vcmask 97280
    %v92 = vsel %vm90, %v76, 0
    %v95 = vsel %vm90, %v77, 0
    %vm97 = vcmask 1043456
    %v99 = vsel %vm97, %v75, 0
    %101 = vmatpush.msra.mxu0 0.0
    %102 = vmatpush.msra.mxu0 0.0
    %103 = vmatpush.msra.mxu0 0.0
    %104 = vmatpush.msra.mxu0 0.0
    %105 = vmatpush.msra.mxu0 0.0
    %106 = vmatpush.msra.mxu0 0.0
    %107 = vmatpush.msra.mxu0 0.0
    %108 = vmatpush.msra.mxu0 0.0
    %109 = vmatpush.msra.mxu0 0.0
    %110 = vmatpush.msra.mxu0 0.0
    %111 = vmatpush.msra.mxu0 0.0
    %112 = vmatpush.msra.mxu0 0.0
    %113 = vmatpush.msra.mxu0 0.0
    %114 = vmatpush.msra.mxu0 0.0
    %115 = vmatpush.msra.mxu0 %v99
    %116 = vmatpush.msra.mxu0 %v74
    %117 = vmatmul.f32.gmra.mxu0 %v92
    %v118 = vpop.f32.mrf.mxu0
    %v119 = vadd.f32 %v83, %v118
    %120 = vmatmul.f32.gmra.mxu0 %v95
    %v121 = vpop.f32.mrf.mxu0
    %v122 = vadd.f32 %v88, %v121
    %123 = vdwg.mxu0
    %v124 = vmax.f32 %v119, 0.0
    %v125 = vmax.f32 %v122, 0.0
    %v126 = vld [vmem:[%s5] sm:$0x1]
    %v127 = vld [vmem:[#allocation2] sm:$0x1]
    %129 = vset.pattern.permute.xlu0 0
    %130 = vperm.xlu0 %129, %v127
    %v131 = vpop.permute.xlu0 %130
    %v133 = vperm.slane %v131, 0
    %v135 = vsel %vm90, %v126, 0
    %v138 = vsel %vm97, %v125, 0
    %140 = vmatpush.msra.mxu0 0.0
    %141 = vmatpush.msra.mxu0 0.0
    %142 = vmatpush.msra.mxu0 0.0
    %143 = vmatpush.msra.mxu0 0.0
    %144 = vmatpush.msra.mxu0 0.0
    %145 = vmatpush.msra.mxu0 0.0
    %146 = vmatpush.msra.mxu0 0.0
    %147 = vmatpush.msra.mxu0 0.0
    %148 = vmatpush.msra.mxu0 0.0
    %149 = vmatpush.msra.mxu0 0.0
    %150 = vmatpush.msra.mxu0 0.0
    %151 = vmatpush.msra.mxu0 0.0
    %152 = vmatpush.msra.mxu0 0.0
    %153 = vmatpush.msra.mxu0 0.0
    %154 = vmatpush.msra.mxu0 %v138
    %155 = vmatpush.msra.mxu0 %v124
    %156 = vmatmul.f32.gmra.mxu0 %v135
    %v157 = vpop.f32.mrf.mxu0
    %v158 = vadd.f32 %v133, %v157
    %159 = vdwg.mxu0
    %160 = vst [vmem:[#allocation3] sm:$0x1] %v158
    // Predicated region
    $region30: #{tpu_custom_call.1} parent=1 // pred_check
      _
    $region31: #{tpu_custom_call.1} parent=1 // pred_check_branch
      %162 = sbr.rel (0) target = $region33
    $region32: #{tpu_custom_call.1} parent=1 // pred_region
      %164 = vsyncadd [#allocation4], 0
      %s166 = sshll.u32 [#allocation3], 4
      %s167 = int_to_ptr.vmem [resolvable:$true] %s166
      %s168 = sshll.u32 %s7, 4
      %s169 = int_to_ptr.hbm [resolvable:$true] %s168
      %171 = dma.vmem_to_hbm [thread:$0]  %s167, 16, %s169, [#allocation4]
    $region33: #{tpu_custom_call.1} parent=1 // pred_fallthru
      _
    // Predicated region
    $region34: #{tpu_custom_call.1} parent=1 // pred_check
      _
    $region35: #{tpu_custom_call.1} parent=1 // pred_check_branch
      %173 = sbr.rel (0) target = $region37
    $region36: #{tpu_custom_call.1} parent=1 // pred_region
      %175 = dma.done [#allocation4], 16
    $region37: #{tpu_custom_call.1} parent=1 // pred_fallthru
      _
    %176 = vsyncpa [#allocation4], 1

</llo_original>
